<compile_context>
chip_gen: v7x
topology: tpu7x:2x2x1
jax: 0.10.0
libtpu: 0.0.40
codegen_flags: <defaults>
</compile_context>

<pallas_src>
import jax
import jax.numpy as jnp
from jax.experimental import pallas as pl
from jax.experimental.pallas import tpu as pltpu


def _round_up(n, m):
    return ((n + m - 1) // m) * m


def _deembed_kernel(x_ref, w_ref, b_ref, o_ref):
    # x_ref: (tm, JD)  rows of the flattened (T*B, J*D) input
    # w_ref: (JD, JF)  block-diagonal de-embedding weight (already transposed)
    # b_ref: (1,  JF)  per-joint bias (root bias in block 0)
    # o_ref: (tm, JF)  output rows; the (M, JF) HBM array is (T, B, J, F)
    y = jnp.dot(x_ref[...], w_ref[...], preferred_element_type=jnp.float32)
    o_ref[...] = (y + b_ref[...].astype(jnp.float32)).astype(o_ref.dtype)


def _pick_row_tile(m, jd, jf, *, hbm_target_bytes=6 << 20,
                   vmem_budget_bytes=32 << 20, min_steps=4):
    """Rows per grid step.

    Large enough that every step moves multiple microseconds of HBM traffic
    (amortizes the ~0.35us/step pipeline overhead and turns output writeback
    into large bursts), small enough that the *lane-padded*, double-buffered
    input+output blocks stay inside a conservative VMEM budget (valid on v5e /
    v6e / v7x once vmem_limit_bytes is raised), and small enough that the grid
    keeps >= `min_steps` steps so v7x's two TensorCores both get work.
    """
    if m <= 256:
        return m
    pad = lambda n: _round_up(n, 128)
    vmem_bytes_per_row = 2 * 4 * (pad(jd) + pad(jf))      # double-buffered in + out
    tm = min(hbm_target_bytes // (4 * jd),                 # ~6 MiB of HBM read / step
             vmem_budget_bytes // vmem_bytes_per_row)      # padded VMEM budget
    tm = min(tm, max(m // min_steps, 256))                 # keep the grid splittable
    tm = max(256, (tm // 256) * 256)                       # lane/sublane friendly
    return min(tm, m)


def output_process_forward(x, w_root, b_root, w_joint, b_joint, *, row_tile=None):
    """x: (T, B, J, D) float32.  w_*: (F, D), b_*: (F,)  (PyTorch Linear layout).

    Returns (B, J, F, T-1), matching the PyTorch module.
    """
    T, B, J, D = x.shape
    F = w_root.shape[0]
    assert w_joint.shape[0] == F, "cat along dim=-2 requires equal feature lens"
    M, JD, JF = T * B, J * D, J * F

    # (T, B, J, D) -> (M, JD): pure reshape, no HBM relayout.
    x2 = x.reshape(M, JD)

    # Block-diagonal transposed weight (JD, JF): block 0 = root, 1..J-1 = joint.
    w_bd_t = jnp.zeros((JD, JF), dtype=x.dtype)
    b_bd = jnp.zeros((JF,), dtype=jnp.float32)
    for j in range(J):
        wj = w_root if j == 0 else w_joint
        bj = b_root if j == 0 else b_joint
        w_bd_t = w_bd_t.at[j * D:(j + 1) * D, j * F:(j + 1) * F].set(wj.T.astype(x.dtype))
        b_bd = b_bd.at[j * F:(j + 1) * F].set(bj.astype(jnp.float32))
    b_bd = b_bd.reshape(1, JF)

    tm = _pick_row_tile(M, JD, JF) if row_tile is None else min(int(row_tile), M)
    grid_m = pl.cdiv(M, tm)

    # Explicit VMEM limit from the lane-padded, double-buffered footprint
    # (v5e scoped default is 16 MiB; v7x physical is 64 MiB/TC -> stay below).
    pad = lambda n: _round_up(n, 128)
    block_bytes = 4 * (2 * tm * pad(JD)                 # streamed x blocks
                       + 2 * tm * pad(JF)               # output blocks
                       + 2 * _round_up(JD, 8) * pad(JF) # resident weight
                       + 2 * 8 * pad(JF))               # resident bias
    vmem_limit = int(min(max(block_bytes + (8 << 20), 32 << 20), 64 << 20))

    cost = pl.CostEstimate(
        flops=2 * M * JD * JF,
        transcendentals=0,
        bytes_accessed=4 * (M * JD + M * JF + JD * JF + JF),
    )

    y = pl.pallas_call(
        _deembed_kernel,
        out_shape=jax.ShapeDtypeStruct((M, JF), x.dtype),
        grid_spec=pltpu.PrefetchScalarGridSpec(
            num_scalar_prefetch=0,
            grid=(grid_m,),
            in_specs=[
                pl.BlockSpec((tm, JD), lambda m: (m, 0)),   # streamed x rows
                pl.BlockSpec((JD, JF), lambda m: (0, 0)),   # resident weight
                pl.BlockSpec((1, JF), lambda m: (0, 0)),    # resident bias
            ],
            out_specs=pl.BlockSpec((tm, JF), lambda m: (m, 0)),
        ),
        compiler_params=pltpu.CompilerParams(
            dimension_semantics=("parallel",),
            vmem_limit_bytes=vmem_limit,
        ),
        cost_estimate=cost,
    )(x2, w_bd_t, b_bd)

    # (M, JF) is exactly (T, B, J, F): drop t=0 (cheap contiguous slice of the
    # leading dim) then one XLA transpose to the module's (B, J, F, T-1).
    out = y.reshape(T, B, J, F)[1:]               # (T-1, B, J, F)
    return jnp.transpose(out, (1, 2, 3, 0))       # (B, J, F, T-1)


def _reference(x, w_root, b_root, w_joint, b_joint):
    root = jnp.einsum("tbd,fd->tbf", x[:, :, 0], w_root) + b_root          # (T,B,F)
    joints = jnp.einsum("tbjd,fd->tbjf", x[:, :, 1:], w_joint) + b_joint   # (T,B,J-1,F)
    out = jnp.concatenate([root[:, :, None, :], joints], axis=-2)          # (T,B,J,F)
    out = jnp.transpose(out, (1, 2, 3, 0))                                 # (B,J,F,T)
    return out[..., 1:]


if __name__ == "__main__":
    # small shapes consistent with the module
    T, B, J, D = 32, 8, 4, 32          # seq, batch, max_joints, latent_dim
    F = 8                              # feature_len == root_feature_len (required by cat)

    key = jax.random.PRNGKey(0)
    kx, kwr, kbr, kwj, kbj = jax.random.split(key, 5)
    x = jax.random.normal(kx, (T, B, J, D), dtype=jnp.float32)
    w_root = jax.random.normal(kwr, (F, D), dtype=jnp.float32) * 0.1
    b_root = jax.random.normal(kbr, (F,), dtype=jnp.float32) * 0.1
    w_joint = jax.random.normal(kwj, (F, D), dtype=jnp.float32) * 0.1
    b_joint = jax.random.normal(kbj, (F,), dtype=jnp.float32) * 0.1

    ref = _reference(x, w_root, b_root, w_joint, b_joint)

    # Default (auto) tiling: single full block at these tiny shapes.
    out = jax.block_until_ready(
        output_process_forward(x, w_root, b_root, w_joint, b_joint))
    assert out.shape == (B, J, F, T - 1), out.shape
    assert jnp.allclose(out, ref, atol=1e-4, rtol=1e-4), "mismatch (auto tile)"

    # Small explicit tile -> 4 grid steps, exercises the pipeline + partial maps.
    out_tiled = jax.block_until_ready(
        output_process_forward(x, w_root, b_root, w_joint, b_joint, row_tile=64))
    assert jnp.allclose(out_tiled, ref, atol=1e-4, rtol=1e-4), "mismatch (tiled)"

    print("KERNEL_OK")
</pallas_src>

<mosaic_0001>
module attributes {stable_mosaic.version = 11 : i64} {
  func.func @_deembed_kernel(%arg0: i32, %arg1: memref<256x128xf32, #tpu.memory_space<vmem>>, %arg2: memref<128x32xf32, #tpu.memory_space<vmem>>, %arg3: memref<1x32xf32, #tpu.memory_space<vmem>>, %arg4: memref<256x32xf32, #tpu.memory_space<vmem>>) attributes {dimension_semantics = [#tpu.dimension_semantics<parallel>], iteration_bounds = array<i64: 1>, scalar_prefetch = 0 : i64, scratch_operands = 0 : i64, tpu.core_type = #tpu.core_type<tc>, window_params = [{transform_indices = @transform_0, window_bounds = array<i64: 256, 128>}, {pipeline_mode = #tpu.pipeline_mode<synchronous>, transform_indices = @transform_1, window_bounds = array<i64: 128, 32>}, {pipeline_mode = #tpu.pipeline_mode<synchronous>, transform_indices = @transform_2, window_bounds = array<i64: 1, 32>}, {transform_indices = @transform_3, window_bounds = array<i64: 256, 32>}]} {
    %c0 = arith.constant 0 : index
    %c0_0 = arith.constant 0 : index
    %0 = vector.load %arg1[%c0, %c0_0] : memref<256x128xf32, #tpu.memory_space<vmem>>, vector<256x128xf32>
    %c0_1 = arith.constant 0 : index
    %c0_2 = arith.constant 0 : index
    %1 = vector.load %arg2[%c0_1, %c0_2] : memref<128x32xf32, #tpu.memory_space<vmem>>, vector<128x32xf32>
    %cst = arith.constant dense<0.000000e+00> : vector<256x32xf32>
    %2 = tpu.matmul %0, %1, %cst {dimension_numbers = #tpu.dot_dimension_numbers<[1], [0], [0], [1], [0, 0, 1, 1], [], []>} : vector<256x128xf32>, vector<128x32xf32>, vector<256x32xf32> -> vector<256x32xf32>
    %c0_3 = arith.constant 0 : index
    %c0_4 = arith.constant 0 : index
    %3 = vector.load %arg3[%c0_3, %c0_4] : memref<1x32xf32, #tpu.memory_space<vmem>>, vector<1x32xf32>
    %4 = vector.broadcast %3 : vector<1x32xf32> to vector<256x32xf32>
    %5 = arith.addf %2, %4 : vector<256x32xf32>
    %c0_5 = arith.constant 0 : index
    %c0_6 = arith.constant 0 : index
    %6 = vector.load %arg4[%c0_5, %c0_6] : memref<256x32xf32, #tpu.memory_space<vmem>>, vector<256x32xf32>
    tpu.vector_store %arg4[%c0_5, %c0_6], %5 {strides = array<i32>} : memref<256x32xf32, #tpu.memory_space<vmem>>, vector<256x32xf32>,
    return
  }
  func.func @transform_0(%arg0: i32) -> (i32, i32) {
    %c0_i32 = arith.constant 0 : i32
    %c0_i32_0 = arith.constant 0 : i32
    return %arg0, %c0_i32 : i32, i32
  }
  func.func @transform_1(%arg0: i32) -> (i32, i32) {
    %c0_i32 = arith.constant 0 : i32
    %c0_i32_0 = arith.constant 0 : i32
    %c0_i32_1 = arith.constant 0 : i32
    return %c0_i32, %c0_i32_0 : i32, i32
  }
  func.func @transform_2(%arg0: i32) -> (i32, i32) {
    %c0_i32 = arith.constant 0 : i32
    %c0_i32_0 = arith.constant 0 : i32
    %c0_i32_1 = arith.constant 0 : i32
    return %c0_i32, %c0_i32_0 : i32, i32
  }
  func.func @transform_3(%arg0: i32) -> (i32, i32) {
    %c0_i32 = arith.constant 0 : i32
    %c0_i32_0 = arith.constant 0 : i32
    return %arg0, %c0_i32 : i32, i32
  }
}

</mosaic_0001>

<llo_original>
// kernel: tpu_custom_call.1
$region0: #{tpu_custom_call.1}
  #allocation0 [shape = 'u32[]', space=smem, size = 0x4, offset = 0x4, fixed_abs, tag = 'smem constant byte address 0x4 - core index']
  #allocation1 [shape = 'u32[144,128]{1,0:T(1,128)}', space=vmem, size = 0x12000, scoped, tag = 'internal scratch']
  %s0 = inlined_call_operand.hbm [shape: f32[256,128], index: 0, kind: input, shape index: {}]
  %s1 = inlined_call_operand.vmem [shape: f32[128,32], index: 1, kind: input, shape index: {}]
  %s2 = inlined_call_operand.vmem [shape: f32[1,32], index: 2, kind: input, shape index: {}]
  %s3 = inlined_call_operand.vmem [shape: f32[256,32], index: 3, kind: output, shape index: {}]
  %s4 = sld [smem:[#allocation0]]
  $region26: #{tpu_custom_call.1} parent=0
    _
  %s6 = ssub.s32 1, %s4
  %s7 = scalar_select 0, %s6, %s4
  $region1: #{tpu_custom_call.1} parent=0
    #allocation2 [shape = 'u8[131072]{0}', space=vmem, size = 0x20000, scoped, tag = 'input window, operand 0, single buffered']
    #allocation3 [shape = 's32[1]{0}', space=sflag, size = 0x4, scoped, tag = 'scoped memory for tpu_custom_call.1']
    %8 = vsyncpa [#allocation3], 0
    // Predicated region
    $region2: #{tpu_custom_call.1} parent=1 // pred_check
      _
    $region3: #{tpu_custom_call.1} parent=1 // pred_check_branch
      %10 = sbr.rel (0) target = $region5
    $region4: #{tpu_custom_call.1} parent=1 // pred_region
      %s12 = ssub.s32 4096, 4096
      %13 = vsyncadd [#allocation3], %s12
      %s14 = sshll.u32 [#allocation2], 4
      %s15 = int_to_ptr.vmem [resolvable:$true] %s14
      %20 = dma.hbm_to_vmem [thread:$0]  %s0, 4096, %s15, [#allocation3], 128, 128, 8
    $region5: #{tpu_custom_call.1} parent=1 // pred_fallthru
      _
    // Predicated region
    $region6: #{tpu_custom_call.1} parent=1 // pred_check
      _
    $region7: #{tpu_custom_call.1} parent=1 // pred_check_branch
      %22 = sbr.rel (0) target = $region9
    $region8: #{tpu_custom_call.1} parent=1 // pred_region
      _
    $region9: #{tpu_custom_call.1} parent=1 // pred_fallthru
      _
    // Predicated region
    $region10: #{tpu_custom_call.1} parent=1 // pred_check
      _
    $region11: #{tpu_custom_call.1} parent=1 // pred_check_branch
      %24 = sbr.rel (0) target = $region13
    $region12: #{tpu_custom_call.1} parent=1 // pred_region
      _
    $region13: #{tpu_custom_call.1} parent=1 // pred_fallthru
      _
    // Predicated region
    $region14: #{tpu_custom_call.1} parent=1 // pred_check
      _
    $region15: #{tpu_custom_call.1} parent=1 // pred_check_branch
      %26 = sbr.rel (0) target = $region17
    $region16: #{tpu_custom_call.1} parent=1 // pred_region
      %27 = dma.done [#allocation3], 4096
    $region17: #{tpu_custom_call.1} parent=1 // pred_fallthru
      _
    %v28 = vld [vmem:[#allocation2] sm:$0xff]
    %v29 = vld [vmem:[#allocation2 + $0x8] sm:$0xff]
    %v30 = vld [vmem:[#allocation2 + $0x10] sm:$0xff]
    %v31 = vld [vmem:[#allocation2 + $0x18] sm:$0xff]
    %v32 = vld [vmem:[#allocation2 + $0x20] sm:$0xff]
    %v33 = vld [vmem:[#allocation2 + $0x28] sm:$0xff]
    %v34 = vld [vmem:[#allocation2 + $0x30] sm:$0xff]
    %v35 = vld [vmem:[#allocation2 + $0x38] sm:$0xff]
    %v36 = vld [vmem:[#allocation2 + $0x40] sm:$0xff]
    %v37 = vld [vmem:[#allocation2 + $0x48] sm:$0xff]
    %v38 = vld [vmem:[#allocation2 + $0x50] sm:$0xff]
    %v39 = vld [vmem:[#allocation2 + $0x58] sm:$0xff]
    %v40 = vld [vmem:[#allocation2 + $0x60] sm:$0xff]
    %v41 = vld [vmem:[#allocation2 + $0x68] sm:$0xff]
    %v42 = vld [vmem:[#allocation2 + $0x70] sm:$0xff]
    %v43 = vld [vmem:[#allocation2 + $0x78] sm:$0xff]
    %v44 = vld [vmem:[#allocation2 + $0x80] sm:$0xff]
    %v45 = vld [vmem:[#allocation2 + $0x88] sm:$0xff]
    %v46 = vld [vmem:[#allocation2 + $0x90] sm:$0xff]
    %v47 = vld [vmem:[#allocation2 + $0x98] sm:$0xff]
    %v48 = vld [vmem:[#allocation2 + $0xa0] sm:$0xff]
    %v49 = vld [vmem:[#allocation2 + $0xa8] sm:$0xff]
    %v50 = vld [vmem:[#allocation2 + $0xb0] sm:$0xff]
    %v51 = vld [vmem:[#allocation2 + $0xb8] sm:$0xff]
    %v52 = vld [vmem:[#allocation2 + $0xc0] sm:$0xff]
    %v53 = vld [vmem:[#allocation2 + $0xc8] sm:$0xff]
    %v54 = vld [vmem:[#allocation2 + $0xd0] sm:$0xff]
    %v55 = vld [vmem:[#allocation2 + $0xd8] sm:$0xff]
    %v56 = vld [vmem:[#allocation2 + $0xe0] sm:$0xff]
    %v57 = vld [vmem:[#allocation2 + $0xe8] sm:$0xff]
    %v58 = vld [vmem:[#allocation2 + $0xf0] sm:$0xff]
    %v59 = vld [vmem:[#allocation2 + $0xf8] sm:$0xff]
    %v60 = vld [vmem:[%s1] sm:$0xff]
    %v61 = vld [vmem:[%s1 + $0x8] sm:$0xff]
    %v62 = vld [vmem:[%s1 + $0x10] sm:$0xff]
    %v63 = vld [vmem:[%s1 + $0x18] sm:$0xff]
    %v64 = vld [vmem:[%s1 + $0x20] sm:$0xff]
    %v65 = vld [vmem:[%s1 + $0x28] sm:$0xff]
    %v66 = vld [vmem:[%s1 + $0x30] sm:$0xff]
    %v67 = vld [vmem:[%s1 + $0x38] sm:$0xff]
    %v68 = vld [vmem:[%s1 + $0x40] sm:$0xff]
    %v69 = vld [vmem:[%s1 + $0x48] sm:$0xff]
    %v70 = vld [vmem:[%s1 + $0x50] sm:$0xff]
    %v71 = vld [vmem:[%s1 + $0x58] sm:$0xff]
    %v72 = vld [vmem:[%s1 + $0x60] sm:$0xff]
    %v73 = vld [vmem:[%s1 + $0x68] sm:$0xff]
    %v74 = vld [vmem:[%s1 + $0x70] sm:$0xff]
    %v75 = vld [vmem:[%s1 + $0x78] sm:$0xff]
    %v76 = vld [vmem:[%s2] sm:$0x1]
    %v78 = vlaneseq
    %v79 = vshrl.u32 %v78, 7
    %v80 = vsub.s32 0, %v79
    %v81 = vrot.slane %v76, %v80
    %83 = vmatprep.subr.mxu0 0.0
    %84 = vmatpush1.msra.mxu0 %v60
    %85 = vmatprep.subr.mxu0 0.0
    %86 = vmatpush1.msra.mxu0 %v61
    %87 = vmatprep.subr.mxu0 0.0
    %88 = vmatpush1.msra.mxu0 %v62
    %89 = vmatprep.subr.mxu0 0.0
    %90 = vmatpush1.msra.mxu0 %v63
    %91 = vmatprep.subr.mxu0 0.0
    %92 = vmatpush1.msra.mxu0 %v64
    %93 = vmatprep.subr.mxu0 0.0
    %94 = vmatpush1.msra.mxu0 %v65
    %95 = vmatprep.subr.mxu0 0.0
    %96 = vmatpush1.msra.mxu0 %v66
    %97 = vmatprep.subr.mxu0 0.0
    %98 = vmatpush1.msra.mxu0 %v67
    %99 = vmatprep.subr.mxu0 0.0
    %100 = vmatpush1.msra.mxu0 %v68
    %101 = vmatprep.subr.mxu0 0.0
    %102 = vmatpush1.msra.mxu0 %v69
    %103 = vmatprep.subr.mxu0 0.0
    %104 = vmatpush1.msra.mxu0 %v70
    %105 = vmatprep.subr.mxu0 0.0
    %106 = vmatpush1.msra.mxu0 %v71
    %107 = vmatprep.subr.mxu0 0.0
    %108 = vmatpush1.msra.mxu0 %v72
    %109 = vmatprep.subr.mxu0 0.0
    %110 = vmatpush1.msra.mxu0 %v73
    %111 = vmatprep.subr.mxu0 0.0
    %112 = vmatpush1.msra.mxu0 %v74
    %113 = vmatprep.subr.mxu0 0.0
    %114 = vmatpush1.msra.mxu0 %v75
    %115 = vmatprep.subr.mxu0 0.0
    %116 = vmatpush1.msra.mxu0 0.0
    %117 = vmatprep.subr.mxu0 0.0
    %118 = vmatpush1.msra.mxu0 0.0
    %119 = vmatprep.subr.mxu0 0.0
    %120 = vmatpush1.msra.mxu0 0.0
    %121 = vmatprep.subr.mxu0 0.0
    %122 = vmatpush1.msra.mxu0 0.0
    %123 = vmatprep.subr.mxu0 0.0
    %124 = vmatpush1.msra.mxu0 0.0
    %125 = vmatprep.subr.mxu0 0.0
    %126 = vmatpush1.msra.mxu0 0.0
    %127 = vmatprep.subr.mxu0 0.0
    %128 = vmatpush1.msra.mxu0 0.0
    %129 = vmatprep.subr.mxu0 0.0
    %130 = vmatpush1.msra.mxu0 0.0
    %131 = vmatprep.subr.mxu0 0.0
    %132 = vmatpush1.msra.mxu0 0.0
    %133 = vmatprep.subr.mxu0 0.0
    %134 = vmatpush1.msra.mxu0 0.0
    %135 = vmatprep.subr.mxu0 0.0
    %136 = vmatpush1.msra.mxu0 0.0
    %137 = vmatprep.subr.mxu0 0.0
    %138 = vmatpush1.msra.mxu0 0.0
    %139 = vmatprep.subr.mxu0 0.0
    %140 = vmatpush1.msra.mxu0 0.0
    %141 = vmatprep.subr.mxu0 0.0
    %142 = vmatpush1.msra.mxu0 0.0
    %143 = vmatprep.subr.mxu0 0.0
    %144 = vmatpush1.msra.mxu0 0.0
    %145 = vmatprep.subr.mxu0 0.0
    %146 = vmatpush1.msra.mxu0 0.0
    %147 = vmatprep.mubr.f32.mxu0 0.0
    %148 = vmatmul.mubr.f32.gmra.mrb[0].mxu0 %v28
    %v149 = vpop.f32.mrb[0].mxu0
    %v150 = vadd.f32 %v81, %v149
    %v151 = vpop.f32.mrb[0].mxu0
    %152 = vmatprep.mubr.f32.mxu0 0.0
    %153 = vmatmul.mubr.f32.gmra.mrb[0].mxu0 %v29
    %v154 = vpop.f32.mrb[0].mxu0
    %v155 = vadd.f32 %v81, %v154
    %v156 = vpop.f32.mrb[0].mxu0
    %157 = vmatprep.mubr.f32.mxu0 0.0
    %158 = vmatmul.mubr.f32.gmra.mrb[0].mxu0 %v30
    %v159 = vpop.f32.mrb[0].mxu0
    %v160 = vadd.f32 %v81, %v159
    %v161 = vpop.f32.mrb[0].mxu0
    %162 = vmatprep.mubr.f32.mxu0 0.0
    %163 = vmatmul.mubr.f32.gmra.mrb[0].mxu0 %v31
    %v164 = vpop.f32.mrb[0].mxu0
    %v165 = vadd.f32 %v81, %v164
    %v166 = vpop.f32.mrb[0].mxu0
    %167 = vmatprep.mubr.f32.mxu0 0.0
    %168 = vmatmul.mubr.f32.gmra.mrb[0].mxu0 %v32
    %v169 = vpop.f32.mrb[0].mxu0
    %v170 = vadd.f32 %v81, %v169
    %v171 = vpop.f32.mrb[0].mxu0
    %172 = vmatprep.mubr.f32.mxu0 0.0
    %173 = vmatmul.mubr.f32.gmra.mrb[0].mxu0 %v33
    %v174 = vpop.f32.mrb[0].mxu0
    %v175 = vadd.f32 %v81, %v174
    %v176 = vpop.f32.mrb[0].mxu0
    %177 = vmatprep.mubr.f32.mxu0 0.0
    %178 = vmatmul.mubr.f32.gmra.mrb[0].mxu0 %v34
    %v179 = vpop.f32.mrb[0].mxu0
    %v180 = vadd.f32 %v81, %v179
    %v181 = vpop.f32.mrb[0].mxu0
    %182 = vmatprep.mubr.f32.mxu0 0.0
    %183 = vmatmul.mubr.f32.gmra.mrb[0].mxu0 %v35
    %v184 = vpop.f32.mrb[0].mxu0
    %v185 = vadd.f32 %v81, %v184
    %v186 = vpop.f32.mrb[0].mxu0
    %187 = vmatprep.mubr.f32.mxu0 0.0
    %188 = vmatmul.mubr.f32.gmra.mrb[0].mxu0 %v36
    %v189 = vpop.f32.mrb[0].mxu0
    %v190 = vadd.f32 %v81, %v189
    %v191 = vpop.f32.mrb[0].mxu0
    %192 = vmatprep.mubr.f32.mxu0 0.0
    %193 = vmatmul.mubr.f32.gmra.mrb[0].mxu0 %v37
    %v194 = vpop.f32.mrb[0].mxu0
    %v195 = vadd.f32 %v81, %v194
    %v196 = vpop.f32.mrb[0].mxu0
    %197 = vmatprep.mubr.f32.mxu0 0.0
    %198 = vmatmul.mubr.f32.gmra.mrb[0].mxu0 %v38
    %v199 = vpop.f32.mrb[0].mxu0
    %v200 = vadd.f32 %v81, %v199
    %v201 = vpop.f32.mrb[0].mxu0
    %202 = vmatprep.mubr.f32.mxu0 0.0
    %203 = vmatmul.mubr.f32.gmra.mrb[0].mxu0 %v39
    %v204 = vpop.f32.mrb[0].mxu0
    %v205 = vadd.f32 %v81, %v204
    %v206 = vpop.f32.mrb[0].mxu0
    %207 = vmatprep.mubr.f32.mxu0 0.0
    %208 = vmatmul.mubr.f32.gmra.mrb[0].mxu0 %v40
    %v209 = vpop.f32.mrb[0].mxu0
    %v210 = vadd.f32 %v81, %v209
    %v211 = vpop.f32.mrb[0].mxu0
    %212 = vmatprep.mubr.f32.mxu0 0.0
    %213 = vmatmul.mubr.f32.gmra.mrb[0].mxu0 %v41
    %v214 = vpop.f32.mrb[0].mxu0
    %v215 = vadd.f32 %v81, %v214
    %v216 = vpop.f32.mrb[0].mxu0
    %217 = vmatprep.mubr.f32.mxu0 0.0
    %218 = vmatmul.mubr.f32.gmra.mrb[0].mxu0 %v42
    %v219 = vpop.f32.mrb[0].mxu0
    %v220 = vadd.f32 %v81, %v219
    %v221 = vpop.f32.mrb[0].mxu0
    %222 = vmatprep.mubr.f32.mxu0 0.0
    %223 = vmatmul.mubr.f32.gmra.mrb[0].mxu0 %v43
    %v224 = vpop.f32.mrb[0].mxu0
    %v225 = vadd.f32 %v81, %v224
    %v226 = vpop.f32.mrb[0].mxu0
    %227 = vmatprep.mubr.f32.mxu0 0.0
    %228 = vmatmul.mubr.f32.gmra.mrb[0].mxu0 %v44
    %v229 = vpop.f32.mrb[0].mxu0
    %v230 = vadd.f32 %v81, %v229
    %v231 = vpop.f32.mrb[0].mxu0
    %232 = vmatprep.mubr.f32.mxu0 0.0
    %233 = vmatmul.mubr.f32.gmra.mrb[0].mxu0 %v45
    %v234 = vpop.f32.mrb[0].mxu0
    %v235 = vadd.f32 %v81, %v234
    %v236 = vpop.f32.mrb[0].mxu0
    %237 = vmatprep.mubr.f32.mxu0 0.0
    %238 = vmatmul.mubr.f32.gmra.mrb[0].mxu0 %v46
    %v239 = vpop.f32.mrb[0].mxu0
    %v240 = vadd.f32 %v81, %v239
    %v241 = vpop.f32.mrb[0].mxu0
    %242 = vmatprep.mubr.f32.mxu0 0.0
    %243 = vmatmul.mubr.f32.gmra.mrb[0].mxu0 %v47
    %v244 = vpop.f32.mrb[0].mxu0
    %v245 = vadd.f32 %v81, %v244
    %v246 = vpop.f32.mrb[0].mxu0
    %247 = vmatprep.mubr.f32.mxu0 0.0
    %248 = vmatmul.mubr.f32.gmra.mrb[0].mxu0 %v48
    %v249 = vpop.f32.mrb[0].mxu0
    %v250 = vadd.f32 %v81, %v249
    %v251 = vpop.f32.mrb[0].mxu0
    %252 = vmatprep.mubr.f32.mxu0 0.0
    %253 = vmatmul.mubr.f32.gmra.mrb[0].mxu0 %v49
    %v254 = vpop.f32.mrb[0].mxu0
    %v255 = vadd.f32 %v81, %v254
    %v256 = vpop.f32.mrb[0].mxu0
    %257 = vmatprep.mubr.f32.mxu0 0.0
    %258 = vmatmul.mubr.f32.gmra.mrb[0].mxu0 %v50
    %v259 = vpop.f32.mrb[0].mxu0
    %v260 = vadd.f32 %v81, %v259
    %v261 = vpop.f32.mrb[0].mxu0
    %262 = vmatprep.mubr.f32.mxu0 0.0
    %263 = vmatmul.mubr.f32.gmra.mrb[0].mxu0 %v51
    %v264 = vpop.f32.mrb[0].mxu0
    %v265 = vadd.f32 %v81, %v264
    %v266 = vpop.f32.mrb[0].mxu0
    %267 = vmatprep.mubr.f32.mxu0 0.0
    %268 = vmatmul.mubr.f32.gmra.mrb[0].mxu0 %v52
    %v269 = vpop.f32.mrb[0].mxu0
    %v270 = vadd.f32 %v81, %v269
    %v271 = vpop.f32.mrb[0].mxu0
    %272 = vmatprep.mubr.f32.mxu0 0.0
    %273 = vmatmul.mubr.f32.gmra.mrb[0].mxu0 %v53
    %v274 = vpop.f32.mrb[0].mxu0
    %v275 = vadd.f32 %v81, %v274
    %v276 = vpop.f32.mrb[0].mxu0
    %277 = vmatprep.mubr.f32.mxu0 0.0
    %278 = vmatmul.mubr.f32.gmra.mrb[0].mxu0 %v54
    %v279 = vpop.f32.mrb[0].mxu0
    %v280 = vadd.f32 %v81, %v279
    %v281 = vpop.f32.mrb[0].mxu0
    %282 = vmatprep.mubr.f32.mxu0 0.0
    %283 = vmatmul.mubr.f32.gmra.mrb[0].mxu0 %v55
    %v284 = vpop.f32.mrb[0].mxu0
    %v285 = vadd.f32 %v81, %v284
    %v286 = vpop.f32.mrb[0].mxu0
    %287 = vmatprep.mubr.f32.mxu0 0.0
    %288 = vmatmul.mubr.f32.gmra.mrb[0].mxu0 %v56
    %v289 = vpop.f32.mrb[0].mxu0
    %v290 = vadd.f32 %v81, %v289
    %v291 = vpop.f32.mrb[0].mxu0
    %292 = vmatprep.mubr.f32.mxu0 0.0
    %293 = vmatmul.mubr.f32.gmra.mrb[0].mxu0 %v57
    %v294 = vpop.f32.mrb[0].mxu0
    %v295 = vadd.f32 %v81, %v294
    %v296 = vpop.f32.mrb[0].mxu0
    %297 = vmatprep.mubr.f32.mxu0 0.0
    %298 = vmatmul.mubr.f32.gmra.mrb[0].mxu0 %v58
    %v299 = vpop.f32.mrb[0].mxu0
    %v300 = vadd.f32 %v81, %v299
    %v301 = vpop.f32.mrb[0].mxu0
    %302 = vmatprep.mubr.f32.mxu0 0.0
    %303 = vmatmul.mubr.f32.gmra.mrb[0].mxu0 %v59
    %v304 = vpop.f32.mrb[0].mxu0
    %v305 = vadd.f32 %v81, %v304
    %v306 = vpop.f32.mrb[0].mxu0
    %307 = vdwg.mxu0
    %vm308 = vcmask 261120
    %309 = vst.msk [vmem:[%s3] sm:$0xff] %vm308, %v150
    %310 = vst.msk [vmem:[%s3 + $0x8] sm:$0xff] %vm308, %v155
    %311 = vst.msk [vmem:[%s3 + $0x10] sm:$0xff] %vm308, %v160
    %312 = vst.msk [vmem:[%s3 + $0x18] sm:$0xff] %vm308, %v165
    %313 = vst.msk [vmem:[%s3 + $0x20] sm:$0xff] %vm308, %v170
    %314 = vst.msk [vmem:[%s3 + $0x28] sm:$0xff] %vm308, %v175
    %315 = vst.msk [vmem:[%s3 + $0x30] sm:$0xff] %vm308, %v180
    %316 = vst.msk [vmem:[%s3 + $0x38] sm:$0xff] %vm308, %v185
    %317 = vst.msk [vmem:[%s3 + $0x40] sm:$0xff] %vm308, %v190
    %318 = vst.msk [vmem:[%s3 + $0x48] sm:$0xff] %vm308, %v195
    %319 = vst.msk [vmem:[%s3 + $0x50] sm:$0xff] %vm308, %v200
    %320 = vst.msk [vmem:[%s3 + $0x58] sm:$0xff] %vm308, %v205
    %321 = vst.msk [vmem:[%s3 + $0x60] sm:$0xff] %vm308, %v210
    %322 = vst.msk [vmem:[%s3 + $0x68] sm:$0xff] %vm308, %v215
    %323 = vst.msk [vmem:[%s3 + $0x70] sm:$0xff] %vm308, %v220
    %324 = vst.msk [vmem:[%s3 + $0x78] sm:$0xff] %vm308, %v225
    %325 = vst.msk [vmem:[%s3 + $0x80] sm:$0xff] %vm308, %v230
    %326 = vst.msk [vmem:[%s3 + $0x88] sm:$0xff] %vm308, %v235
    %327 = vst.msk [vmem:[%s3 + $0x90] sm:$0xff] %vm308, %v240
    %328 = vst.msk [vmem:[%s3 + $0x98] sm:$0xff] %vm308, %v245
    %329 = vst.msk [vmem:[%s3 + $0xa0] sm:$0xff] %vm308, %v250
    %330 = vst.msk [vmem:[%s3 + $0xa8] sm:$0xff] %vm308, %v255
    %331 = vst.msk [vmem:[%s3 + $0xb0] sm:$0xff] %vm308, %v260
    %332 = vst.msk [vmem:[%s3 + $0xb8] sm:$0xff] %vm308, %v265
    %333 = vst.msk [vmem:[%s3 + $0xc0] sm:$0xff] %vm308, %v270
    %334 = vst.msk [vmem:[%s3 + $0xc8] sm:$0xff] %vm308, %v275
    %335 = vst.msk [vmem:[%s3 + $0xd0] sm:$0xff] %vm308, %v280
    %336 = vst.msk [vmem:[%s3 + $0xd8] sm:$0xff] %vm308, %v285
    %337 = vst.msk [vmem:[%s3 + $0xe0] sm:$0xff] %vm308, %v290
    %338 = vst.msk [vmem:[%s3 + $0xe8] sm:$0xff] %vm308, %v295
    %339 = vst.msk [vmem:[%s3 + $0xf0] sm:$0xff] %vm308, %v300
    %340 = vst.msk [vmem:[%s3 + $0xf8] sm:$0xff] %vm308, %v305
    // Predicated region
    $region18: #{tpu_custom_call.1} parent=1 // pred_check
      _
    $region19: #{tpu_custom_call.1} parent=1 // pred_check_branch
      %342 = sbr.rel (0) target = $region21
    $region20: #{tpu_custom_call.1} parent=1 // pred_region
      _
    $region21: #{tpu_custom_call.1} parent=1 // pred_fallthru
      _
    // Predicated region
    $region22: #{tpu_custom_call.1} parent=1 // pred_check
      _
    $region23: #{tpu_custom_call.1} parent=1 // pred_check_branch
      %344 = sbr.rel (0) target = $region25
    $region24: #{tpu_custom_call.1} parent=1 // pred_region
      _
    $region25: #{tpu_custom_call.1} parent=1 // pred_fallthru
      _
    %345 = vsyncpa [#allocation3], 1

</llo_original>
